<compile_context>
chip_gen: v6e
topology: v6e:2x2x1
jax: 0.10.0
libtpu: 0.0.40
codegen_flags: <defaults>
</compile_context>

<pallas_src>
import jax
import jax.numpy as jnp
import numpy as np
from jax.experimental import pallas as pl
from jax.experimental.pallas import tpu as pltpu


# ---------------------------------------------------------------------------
# Helpers
# ---------------------------------------------------------------------------

_VMEM_TILE_BUDGET = 12 * 1024 * 1024   # double-buffered tile bytes per kernel
_VMEM_LIMIT = 32 * 1024 * 1024         # scoped VMEM limit (safe on v5e/v6e/v7x)


def _round_up(n: int, m: int) -> int:
    return ((n + m - 1) // m) * m


def _pick_tile(hw_pad: int, bytes_per_lane: int,
               budget: int = _VMEM_TILE_BUDGET, n_buffers: int = 2) -> int:
    """Largest lane count (multiple of 128 that divides hw_pad) whose
    double-buffered tile footprint stays under `budget` bytes."""
    max_lanes = max(128, budget // (bytes_per_lane * n_buffers))
    tm = 128
    t = 128
    while t <= hw_pad and t <= max_lanes:
        if hw_pad % t == 0:
            tm = t
        t += 128
    return tm


def calc_w(params):
    """W = P @ (L*l_mask + I) @ (U*u_mask + diag(s_sign*exp(w_logs)))  (CxC)."""
    s = params["s_sign"] * jnp.exp(params["w_logs"])
    L = params["w_l"] * params["l_mask"] + params["l_eye"]
    U = params["w_u"] * params["u_mask"] + jnp.diag(s)
    return params["w_p"] @ L @ U


def _conv2d(x, w, b, padding):
    out = jax.lax.conv_general_dilated(
        x, w, window_strides=(1, 1), padding=padding,
        dimension_numbers=("NCHW", "OIHW", "NCHW"))
    return out + b.reshape(1, -1, 1, 1)


def nn_forward(xb, params, zw_eff, zb_eff):
    """Coupling NN: conv3x3 -> relu -> conv1x1 -> relu -> (folded) ZeroConv2d.

    zw_eff/zb_eff already contain the exp(3*zconv_scale) factor and a channel
    permutation so the output is [t_channels..., s_channels...]."""
    h = _conv2d(xb, params["conv1_w"], params["conv1_b"], ((1, 1), (1, 1)))
    h = jnp.maximum(h, 0.0)
    h = _conv2d(h, params["conv2_w"], params["conv2_b"], ((0, 0), (0, 0)))
    h = jnp.maximum(h, 0.0)
    h = jnp.pad(h, ((0, 0), (0, 0), (1, 1), (1, 1)), constant_values=1.0)
    return _conv2d(h, zw_eff, zb_eff, ((0, 0), (0, 0)))


# ---------------------------------------------------------------------------
# Fused ActNorm + InvConv2dLU (Pallas)
# ---------------------------------------------------------------------------

def actnorm_invconv_forward(x, params, logdet=None):
    """x: (N, C, H, W) f32.  Returns (out3, logdet) with out3 of shape
    (N, C, HW_pad): flattened spatial, lane-padded to a multiple of 128."""
    N, C, H, W = x.shape
    HW = H * W
    HW_pad = _round_up(HW, 128)

    # Hoisted tiny computations: W reconstruction + ActNorm folding.
    #   W @ ((x + bias) * scale) == (W*scale) @ x + W @ (scale*bias)
    w_mat = calc_w(params)                                   # (C, C)
    scale = jnp.exp(3.0 * params["an_logscale"]) + 1e-9      # (C,)
    bias = params["an_bias"]                                 # (C,)
    ws = (w_mat * scale[None, :]).astype(jnp.float32)        # (C, C)
    c_col = (w_mat @ (scale * bias)).reshape(C, 1).astype(jnp.float32)

    x3 = x.reshape(N, C, HW).astype(jnp.float32)
    if HW_pad != HW:
        x3 = jnp.pad(x3, ((0, 0), (0, 0), (0, HW_pad - HW)))

    TM = _pick_tile(HW_pad, bytes_per_lane=2 * C * 4)
    n_tiles = HW_pad // TM

    def kernel(w_ref, c_ref, x_ref, o_ref):
        o_ref[...] = (
            jnp.dot(w_ref[...], x_ref[...], preferred_element_type=jnp.float32)
            + c_ref[...]
        ).astype(o_ref.dtype)

    act_spec = pl.BlockSpec((None, C, TM), lambda n, j: (n, 0, j))
    out3 = pl.pallas_call(
        kernel,
        out_shape=jax.ShapeDtypeStruct((N, C, HW_pad), jnp.float32),
        grid=(N, n_tiles),
        in_specs=[pl.BlockSpec((C, C), lambda n, j: (0, 0)),
                  pl.BlockSpec((C, 1), lambda n, j: (0, 0)),
                  act_spec],
        out_specs=act_spec,
        compiler_params=pltpu.CompilerParams(
            dimension_semantics=("parallel", "parallel"),
            vmem_limit_bytes=_VMEM_LIMIT),
        cost_estimate=pl.CostEstimate(
            flops=2 * C * C * N * HW_pad + C * N * HW_pad,
            transcendentals=0,
            bytes_accessed=4 * (2 * N * C * HW_pad + C * C + C)),
    )(ws, c_col, x3)

    # logdet bookkeeping mirrors the torch modules: ActNorm's dlogdet only
    # accumulates when logdet is not None; InvConv2dLU always contributes.
    dlogdet_an = jnp.sum(3.0 * params["an_logscale"]) * float(HW)
    if logdet is not None:
        logdet = logdet + dlogdet_an
    dlogdet_ic = float(HW) * jnp.sum(params["w_logs"])
    logdet = dlogdet_ic if logdet is None else logdet + dlogdet_ic
    return out3, logdet


# ---------------------------------------------------------------------------
# AffineCoupling (Pallas elementwise tail, fused split/concat/logdet-reduce)
# ---------------------------------------------------------------------------

def affine_coupling_forward(x3, img_shape, logdet, params):
    """x3: (N, C, HW_pad) flattened activations from the invconv stage."""
    N, C, H, W = img_shape
    Ch = C // 2
    HW = H * W
    HW_pad = x3.shape[-1]

    # Fold exp(3*zconv_scale) into ZeroConv2d weights/bias and pre-permute its
    # output channels so channels [:Ch] == xm[:, 0::2] (t) and
    # [Ch:] == xm[:, 1::2] (s_raw).  Pure weight-side work, negligible.
    exp3s = jnp.exp(3.0 * params["zconv_scale"])
    perm = np.concatenate([np.arange(0, C, 2), np.arange(1, C, 2)])
    zw_eff = (params["zconv_w"] * exp3s[:, None, None, None])[perm]
    zb_eff = (params["zconv_b"] * exp3s)[perm]

    xb_nchw = x3[:, Ch:, :HW].reshape(N, Ch, H, W)        # needed for the convs
    xm = nn_forward(xb_nchw, params, zw_eff, zb_eff)      # (N, C, H, W)
    xm3 = xm.reshape(N, C, HW).astype(jnp.float32)
    if HW_pad != HW:
        xm3 = jnp.pad(xm3, ((0, 0), (0, 0), (0, HW_pad - HW)))

    TM = _pick_tile(HW_pad, bytes_per_lane=3 * C * 4)
    n_tiles = HW_pad // TM

    def kernel(x_ref, xm_ref, y_ref, part_ref):
        xa = x_ref[:Ch, :]
        xb = x_ref[Ch:, :]
        t = xm_ref[:Ch, :]
        s_raw = xm_ref[Ch:, :]
        s = 1.0 / (1.0 + jnp.exp(-(s_raw + 2.0))) + 1e-9
        y_ref[:Ch, :] = (xa + t) * s
        y_ref[Ch:, :] = xb                                   # pass-through (no concat)
        log_s = jnp.log(s)
        if HW_pad != HW:   # static: mask padded lanes out of the reduction
            lane = jax.lax.broadcasted_iota(jnp.int32, (Ch, TM), 1)
            valid = (pl.program_id(1) * TM + lane) < HW
            log_s = jnp.where(valid, log_s, 0.0)
        part_ref[...] = jnp.sum(log_s, keepdims=True)        # (1, 1) partial sum

    act_spec = pl.BlockSpec((None, C, TM), lambda n, j: (n, 0, j))
    part_spec = pl.BlockSpec((None, None, 1, 1), lambda n, j: (n, j, 0, 0))
    y3, partial = pl.pallas_call(
        kernel,
        out_shape=(jax.ShapeDtypeStruct((N, C, HW_pad), jnp.float32),
                   jax.ShapeDtypeStruct((N, n_tiles, 1, 1), jnp.float32)),
        grid=(N, n_tiles),
        in_specs=[act_spec, act_spec],
        out_specs=(act_spec, part_spec),
        compiler_params=pltpu.CompilerParams(
            dimension_semantics=("parallel", "parallel"),
            vmem_limit_bytes=_VMEM_LIMIT),
        cost_estimate=pl.CostEstimate(
            flops=4 * N * Ch * HW_pad,
            transcendentals=2 * N * Ch * HW_pad,
            bytes_accessed=4 * 3 * N * C * HW_pad),
    )(x3, xm3)

    if HW_pad != HW:
        y3 = y3[:, :, :HW]
    y = y3.reshape(N, C, H, W)
    logdet = jnp.sum(partial, axis=(1, 2, 3)) + logdet
    return y, logdet


def flow_forward(x, params, logdet=None):
    """One-step Flow: ActNorm -> InvConv2dLU -> AffineCoupling."""
    N, C, H, W = x.shape
    out3, logdet = actnorm_invconv_forward(x, params, logdet)
    y, logdet = affine_coupling_forward(out3, (N, C, H, W), logdet, params)
    return y, logdet


# ---------------------------------------------------------------------------
# Parameter initialization (mirrors the torch module __init__ / first forward)
# ---------------------------------------------------------------------------

def actnorm_initialize(x):
    """Data-dependent ActNorm init (first-forward behavior of the torch module)."""
    mean = jnp.mean(x, axis=(0, 2, 3))
    std = jnp.std(x, axis=(0, 2, 3), ddof=1)      # torch.std is unbiased
    return -mean, jnp.log(1.0 / (std + 1e-9)) / 3.0


def init_params(key, in_channel, hidden_size):
    k_w, k_c1, k_c2 = jax.random.split(key, 3)
    # InvConv2dLU
    weight = jax.random.normal(k_w, (in_channel, in_channel), jnp.float32)
    Q, _ = jnp.linalg.qr(weight)
    P, L, U = jax.scipy.linalg.lu(Q)              # Q = P @ L @ U
    w_s = jnp.diag(U)
    u_mask = jnp.triu(jnp.ones((in_channel, in_channel), jnp.float32), 1)
    params = {
        "w_p": P.astype(jnp.float32),
        "w_l": L.astype(jnp.float32),
        "w_u": jnp.triu(U, 1).astype(jnp.float32),
        "u_mask": u_mask,
        "l_mask": u_mask.T,
        "l_eye": jnp.eye(in_channel, dtype=jnp.float32),
        "s_sign": jnp.sign(w_s).astype(jnp.float32),
        "w_logs": jnp.log(jnp.abs(w_s)).astype(jnp.float32),
        # ActNorm (filled by actnorm_initialize on first forward)
        "an_bias": jnp.zeros((in_channel,), jnp.float32),
        "an_logscale": jnp.zeros((in_channel,), jnp.float32),
    }
    # AffineCoupling NN
    ch = in_channel // 2
    params["conv1_w"] = 0.05 * jax.random.normal(k_c1, (hidden_size, ch, 3, 3), jnp.float32)
    params["conv1_b"] = jnp.zeros((hidden_size,), jnp.float32)
    params["conv2_w"] = 0.05 * jax.random.normal(k_c2, (hidden_size, hidden_size, 1, 1), jnp.float32)
    params["conv2_b"] = jnp.zeros((hidden_size,), jnp.float32)
    # ZeroConv2d is zero-initialized exactly like the torch module.
    params["zconv_w"] = jnp.zeros((in_channel, hidden_size, 3, 3), jnp.float32)
    params["zconv_b"] = jnp.zeros((in_channel,), jnp.float32)
    params["zconv_scale"] = jnp.zeros((in_channel,), jnp.float32)
    return params


# ---------------------------------------------------------------------------
# Pure-JAX reference (mirrors the torch Flow.forward op-for-op)
# ---------------------------------------------------------------------------

def _reference_nn(xb, params):
    h = _conv2d(xb, params["conv1_w"], params["conv1_b"], ((1, 1), (1, 1)))
    h = jnp.maximum(h, 0.0)
    h = _conv2d(h, params["conv2_w"], params["conv2_b"], ((0, 0), (0, 0)))
    h = jnp.maximum(h, 0.0)
    h = jnp.pad(h, ((0, 0), (0, 0), (1, 1), (1, 1)), constant_values=1.0)
    h = _conv2d(h, params["zconv_w"], params["zconv_b"], ((0, 0), (0, 0)))
    return h * jnp.exp(3.0 * params["zconv_scale"]).reshape(1, -1, 1, 1)


def _reference_flow(x, params, logdet=None):
    N, C, H, W = x.shape
    # ActNorm
    bias = params["an_bias"].reshape(1, C, 1, 1)
    logscale = params["an_logscale"].reshape(1, C, 1, 1)
    xs = (x + bias) * (jnp.exp(3.0 * logscale) + 1e-9)
    dlogdet_an = jnp.sum(3.0 * logscale) * (H * W)
    if logdet is not None:
        logdet = logdet + dlogdet_an
    # InvConv2dLU
    Wm = calc_w(params)
    out = jnp.einsum("oc,nchw->nohw", Wm, xs)
    dlogdet_ic = (H * W) * jnp.sum(params["w_logs"])
    logdet = dlogdet_ic if logdet is None else logdet + dlogdet_ic
    # AffineCoupling
    Ch = C // 2
    xa, xb = out[:, :Ch], out[:, Ch:]
    xm = _reference_nn(xb, params)
    t = xm[:, 0::2]
    s_raw = xm[:, 1::2]
    s = 1.0 / (1.0 + jnp.exp(-(s_raw + 2.0))) + 1e-9
    ya = (xa + t) * s
    y = jnp.concatenate([ya, xb], axis=1)
    logdet = jnp.sum(jnp.log(s).reshape(N, -1), axis=1) + logdet
    return y, logdet


if __name__ == "__main__":
    key = jax.random.PRNGKey(0)
    k_p, k_x, k_z1, k_z2, k_z3 = jax.random.split(key, 5)

    N, C, H, W = 2, 4, 16, 16
    HIDDEN = 32
    params = init_params(k_p, C, HIDDEN)
    x = jax.random.normal(k_x, (N, C, H, W), dtype=jnp.float32)

    # ActNorm data-dependent init (first forward of the torch module).
    an_bias, an_logscale = actnorm_initialize(x)
    params["an_bias"], params["an_logscale"] = an_bias, an_logscale

    flow_fn = jax.jit(flow_forward)

    # --- Test 1: faithful init (ZeroConv2d zeroed => NN output is 0) ---
    y, logdet = flow_fn(x, params)
    y = jax.block_until_ready(y)
    logdet = jax.block_until_ready(logdet)
    y_ref, logdet_ref = _reference_flow(x, params, logdet=None)
    assert y.shape == (N, C, H, W)
    np.testing.assert_allclose(np.asarray(y), np.asarray(y_ref), rtol=1e-4, atol=1e-4)
    np.testing.assert_allclose(np.asarray(logdet), np.asarray(logdet_ref), rtol=1e-4, atol=1e-4)

    # --- Test 2: perturb ZeroConv2d params to exercise the data-dependent coupling path ---
    params2 = dict(params)
    params2["zconv_w"] = 0.02 * jax.random.normal(k_z1, params["zconv_w"].shape, jnp.float32)
    params2["zconv_b"] = 0.02 * jax.random.normal(k_z2, params["zconv_b"].shape, jnp.float32)
    params2["zconv_scale"] = 0.1 * jax.random.normal(k_z3, params["zconv_scale"].shape, jnp.float32)
    y2, logdet2 = flow_fn(x, params2)
    y2 = jax.block_until_ready(y2)
    logdet2 = jax.block_until_ready(logdet2)
    y2_ref, logdet2_ref = _reference_flow(x, params2, logdet=None)
    np.testing.assert_allclose(np.asarray(y2), np.asarray(y2_ref), rtol=1e-4, atol=1e-4)
    np.testing.assert_allclose(np.asarray(logdet2), np.asarray(logdet2_ref), rtol=1e-4, atol=1e-4)

    print("KERNEL_OK")
</pallas_src>

<mosaic_0001>
module attributes {stable_mosaic.version = 11 : i64} {
  func.func @kernel(%arg0: i32, %arg1: i32, %arg2: memref<4x4xf32, #tpu.memory_space<vmem>>, %arg3: memref<4x1xf32, #tpu.memory_space<vmem>>, %arg4: memref<1x4x256xf32, #tpu.memory_space<vmem>>, %arg5: memref<1x4x256xf32, #tpu.memory_space<vmem>>) attributes {dimension_semantics = [#tpu.dimension_semantics<parallel>, #tpu.dimension_semantics<parallel>], iteration_bounds = array<i64: 2, 1>, scalar_prefetch = 0 : i64, scratch_operands = 0 : i64, tpu.core_type = #tpu.core_type<tc>, window_params = [{pipeline_mode = #tpu.pipeline_mode<synchronous>, transform_indices = @transform_0, window_bounds = array<i64: 4, 4>}, {pipeline_mode = #tpu.pipeline_mode<synchronous>, transform_indices = @transform_1, window_bounds = array<i64: 4, 1>}, {transform_indices = @transform_2, window_bounds = array<i64: 1, 4, 256>}, {transform_indices = @transform_3, window_bounds = array<i64: 1, 4, 256>}]} {
    %c0 = arith.constant 0 : index
    %c0_0 = arith.constant 0 : index
    %0 = vector.load %arg2[%c0, %c0_0] : memref<4x4xf32, #tpu.memory_space<vmem>>, vector<4x4xf32>
    %c0_1 = arith.constant 0 : index
    %c0_2 = arith.constant 0 : index
    %c0_3 = arith.constant 0 : index
    %1 = vector.load %arg4[%c0_1, %c0_2, %c0_3] : memref<1x4x256xf32, #tpu.memory_space<vmem>>, vector<1x4x256xf32>
    %2 = vector.shape_cast %1 : vector<1x4x256xf32> to vector<4x256xf32>
    %cst = arith.constant dense<0.000000e+00> : vector<4x256xf32>
    %3 = tpu.matmul %0, %2, %cst {dimension_numbers = #tpu.dot_dimension_numbers<[1], [0], [0], [1], [0, 0, 1, 1], [], []>} : vector<4x4xf32>, vector<4x256xf32>, vector<4x256xf32> -> vector<4x256xf32>
    %c0_4 = arith.constant 0 : index
    %c0_5 = arith.constant 0 : index
    %4 = vector.load %arg3[%c0_4, %c0_5] : memref<4x1xf32, #tpu.memory_space<vmem>>, vector<4x1xf32>
    %5 = vector.broadcast %4 : vector<4x1xf32> to vector<4x256xf32>
    %6 = arith.addf %3, %5 : vector<4x256xf32>
    %c0_6 = arith.constant 0 : index
    %c0_7 = arith.constant 0 : index
    %c0_8 = arith.constant 0 : index
    %7 = vector.load %arg5[%c0_6, %c0_7, %c0_8] : memref<1x4x256xf32, #tpu.memory_space<vmem>>, vector<1x4x256xf32>
    %8 = vector.shape_cast %7 : vector<1x4x256xf32> to vector<4x256xf32>
    %9 = vector.shape_cast %6 : vector<4x256xf32> to vector<1x4x256xf32>
    tpu.vector_store %arg5[%c0_6, %c0_7, %c0_8], %9 {strides = array<i32>} : memref<1x4x256xf32, #tpu.memory_space<vmem>>, vector<1x4x256xf32>,
    return
  }
  func.func @transform_0(%arg0: i32, %arg1: i32) -> (i32, i32) {
    %c0_i32 = arith.constant 0 : i32
    %c0_i32_0 = arith.constant 0 : i32
    %c0_i32_1 = arith.constant 0 : i32
    return %c0_i32, %c0_i32_0 : i32, i32
  }
  func.func @transform_1(%arg0: i32, %arg1: i32) -> (i32, i32) {
    %c0_i32 = arith.constant 0 : i32
    %c0_i32_0 = arith.constant 0 : i32
    %c0_i32_1 = arith.constant 0 : i32
    return %c0_i32, %c0_i32_0 : i32, i32
  }
  func.func @transform_2(%arg0: i32, %arg1: i32) -> (i32, i32, i32) {
    %c0_i32 = arith.constant 0 : i32
    %c0_i32_0 = arith.constant 0 : i32
    return %arg0, %c0_i32, %arg1 : i32, i32, i32
  }
  func.func @transform_3(%arg0: i32, %arg1: i32) -> (i32, i32, i32) {
    %c0_i32 = arith.constant 0 : i32
    %c0_i32_0 = arith.constant 0 : i32
    return %arg0, %c0_i32, %arg1 : i32, i32, i32
  }
}

module attributes {stable_mosaic.version = 11 : i64} {
  func.func @kernel(%arg0: i32, %arg1: i32, %arg2: memref<1x4x256xf32, #tpu.memory_space<vmem>>, %arg3: memref<1x4x256xf32, #tpu.memory_space<vmem>>, %arg4: memref<1x4x256xf32, #tpu.memory_space<vmem>>, %arg5: memref<1x1x1x1xf32, #tpu.memory_space<vmem>>) attributes {dimension_semantics = [#tpu.dimension_semantics<parallel>, #tpu.dimension_semantics<parallel>], iteration_bounds = array<i64: 2, 1>, scalar_prefetch = 0 : i64, scratch_operands = 0 : i64, tpu.core_type = #tpu.core_type<tc>, window_params = [{transform_indices = @transform_0, window_bounds = array<i64: 1, 4, 256>}, {transform_indices = @transform_1, window_bounds = array<i64: 1, 4, 256>}, {transform_indices = @transform_2, window_bounds = array<i64: 1, 4, 256>}, {transform_indices = @transform_3, window_bounds = array<i64: 1, 1, 1, 1>}]} {
    %c0 = arith.constant 0 : index
    %c0_0 = arith.constant 0 : index
    %c0_1 = arith.constant 0 : index
    %0 = vector.load %arg2[%c0, %c0_0, %c0_1] : memref<1x4x256xf32, #tpu.memory_space<vmem>>, vector<1x2x256xf32>
    %1 = vector.shape_cast %0 : vector<1x2x256xf32> to vector<2x256xf32>
    %c0_2 = arith.constant 0 : index
    %c2 = arith.constant 2 : index
    %c0_3 = arith.constant 0 : index
    %2 = vector.load %arg2[%c0_2, %c2, %c0_3] : memref<1x4x256xf32, #tpu.memory_space<vmem>>, vector<1x2x256xf32>
    %3 = vector.shape_cast %2 : vector<1x2x256xf32> to vector<2x256xf32>
    %c0_4 = arith.constant 0 : index
    %c0_5 = arith.constant 0 : index
    %c0_6 = arith.constant 0 : index
    %4 = vector.load %arg3[%c0_4, %c0_5, %c0_6] : memref<1x4x256xf32, #tpu.memory_space<vmem>>, vector<1x2x256xf32>
    %5 = vector.shape_cast %4 : vector<1x2x256xf32> to vector<2x256xf32>
    %c0_7 = arith.constant 0 : index
    %c2_8 = arith.constant 2 : index
    %c0_9 = arith.constant 0 : index
    %6 = vector.load %arg3[%c0_7, %c2_8, %c0_9] : memref<1x4x256xf32, #tpu.memory_space<vmem>>, vector<1x2x256xf32>
    %7 = vector.shape_cast %6 : vector<1x2x256xf32> to vector<2x256xf32>
    %cst = arith.constant 2.000000e+00 : f32
    %8 = vector.broadcast %cst : f32 to vector<2x256xf32>
    %9 = arith.addf %7, %8 : vector<2x256xf32>
    %cst_10 = arith.constant 0.000000e+00 : f32
    %10 = vector.broadcast %cst_10 : f32 to vector<2x256xf32>
    %11 = arith.subf %10, %9 : vector<2x256xf32>
    %12 = math.exp %11 : vector<2x256xf32>
    %cst_11 = arith.constant 1.000000e+00 : f32
    %13 = vector.broadcast %cst_11 : f32 to vector<2x256xf32>
    %14 = arith.addf %13, %12 : vector<2x256xf32>
    %cst_12 = arith.constant 1.000000e+00 : f32
    %15 = vector.broadcast %cst_12 : f32 to vector<2x256xf32>
    %16 = arith.divf %15, %14 : vector<2x256xf32>
    %cst_13 = arith.constant 9.99999971E-10 : f32
    %17 = vector.broadcast %cst_13 : f32 to vector<2x256xf32>
    %18 = arith.addf %16, %17 : vector<2x256xf32>
    %19 = arith.addf %1, %5 : vector<2x256xf32>
    %20 = arith.mulf %19, %18 : vector<2x256xf32>
    %c0_14 = arith.constant 0 : index
    %c0_15 = arith.constant 0 : index
    %c0_16 = arith.constant 0 : index
    %21 = vector.load %arg4[%c0_14, %c0_15, %c0_16] : memref<1x4x256xf32, #tpu.memory_space<vmem>>, vector<1x2x256xf32>
    %22 = vector.shape_cast %21 : vector<1x2x256xf32> to vector<2x256xf32>
    %23 = vector.shape_cast %20 : vector<2x256xf32> to vector<1x2x256xf32>
    tpu.vector_store %arg4[%c0_14, %c0_15, %c0_16], %23 {strides = array<i32>} : memref<1x4x256xf32, #tpu.memory_space<vmem>>, vector<1x2x256xf32>,
    %c0_17 = arith.constant 0 : index
    %c2_18 = arith.constant 2 : index
    %c0_19 = arith.constant 0 : index
    %24 = vector.load %arg4[%c0_17, %c2_18, %c0_19] : memref<1x4x256xf32, #tpu.memory_space<vmem>>, vector<1x2x256xf32>
    %25 = vector.shape_cast %24 : vector<1x2x256xf32> to vector<2x256xf32>
    %26 = vector.shape_cast %3 : vector<2x256xf32> to vector<1x2x256xf32>
    tpu.vector_store %arg4[%c0_17, %c2_18, %c0_19], %26 {strides = array<i32>} : memref<1x4x256xf32, #tpu.memory_space<vmem>>, vector<1x2x256xf32>,
    %27 = math.log %18 : vector<2x256xf32>
    %28 = vector.shape_cast %27 : vector<2x256xf32> to vector<1x2x256xf32>
    %cst_20 = arith.constant dense<0.000000e+00> : vector<1xf32>
    %29 = vector.multi_reduction <add>, %28, %cst_20 [1, 2] : vector<1x2x256xf32> to vector<1xf32>
    %30 = vector.shape_cast %29 : vector<1xf32> to vector<1x1x1xf32>
    %31 = vector.extract %30[0, 0, 0] : f32 from vector<1x1x1xf32>
    %32 = vector.broadcast %31 : f32 to vector<1x1xf32>
    %c0_21 = arith.constant 0 : index
    %c0_22 = arith.constant 0 : index
    %c0_23 = arith.constant 0 : index
    %c0_24 = arith.constant 0 : index
    %33 = vector.load %arg5[%c0_21, %c0_22, %c0_23, %c0_24] : memref<1x1x1x1xf32, #tpu.memory_space<vmem>>, vector<1x1x1x1xf32>
    %34 = vector.shape_cast %33 : vector<1x1x1x1xf32> to vector<1x1xf32>
    %35 = vector.shape_cast %32 : vector<1x1xf32> to vector<1x1x1x1xf32>
    tpu.vector_store %arg5[%c0_21, %c0_22, %c0_23, %c0_24], %35 {strides = array<i32>} : memref<1x1x1x1xf32, #tpu.memory_space<vmem>>, vector<1x1x1x1xf32>,
    return
  }
  func.func @transform_0(%arg0: i32, %arg1: i32) -> (i32, i32, i32) {
    %c0_i32 = arith.constant 0 : i32
    %c0_i32_0 = arith.constant 0 : i32
    return %arg0, %c0_i32, %arg1 : i32, i32, i32
  }
  func.func @transform_1(%arg0: i32, %arg1: i32) -> (i32, i32, i32) {
    %c0_i32 = arith.constant 0 : i32
    %c0_i32_0 = arith.constant 0 : i32
    return %arg0, %c0_i32, %arg1 : i32, i32, i32
  }
  func.func @transform_2(%arg0: i32, %arg1: i32) -> (i32, i32, i32) {
    %c0_i32 = arith.constant 0 : i32
    %c0_i32_0 = arith.constant 0 : i32
    return %arg0, %c0_i32, %arg1 : i32, i32, i32
  }
  func.func @transform_3(%arg0: i32, %arg1: i32) -> (i32, i32, i32, i32) {
    %c0_i32 = arith.constant 0 : i32
    %c0_i32_0 = arith.constant 0 : i32
    %c0_i32_1 = arith.constant 0 : i32
    return %arg0, %arg1, %c0_i32, %c0_i32_0 : i32, i32, i32, i32
  }
}

</mosaic_0001>

<llo_original>
// kernel: flow_forward.2
$region0: #{flow_forward.2}
  #allocation0 [shape = 'u32[]', space=smem, size = 0x4, offset = 0x4, fixed_abs, tag = 'smem constant byte address 0x4 - core index']
  #allocation1 [shape = 'u32[144,128]{1,0:T(1,128)}', space=vmem, size = 0x12000, scoped, tag = 'internal scratch']
  %s0 = inlined_call_operand.vmem [shape: f32[4,4], index: 0, kind: input, shape index: {}]
  %s1 = inlined_call_operand.vmem [shape: f32[4,1], index: 1, kind: input, shape index: {}]
  %s2 = inlined_call_operand.vmem [shape: f32[2,4,256], index: 2, kind: input, shape index: {}]
  %s3 = inlined_call_operand.vmem [shape: f32[2,4,256], index: 3, kind: output, shape index: {}]
  %s4 = sld [smem:[#allocation0]]
  $region45: #{flow_forward.2} parent=0
    _
  %s6 = ssub.s32 1, %s4
  %s7 = scalar_select 0, %s6, %s4
  loop: start=0, step=1, limit=4
  $region2: #{flow_forward.2} parent=0 // loop_pre_header
    _
  $region3: #{flow_forward.2} parent=0 // loop_header
    %s9 = sphi 0, %s13
    %p10 = scmp.ge.s32.totalorder %s9, 4
    %s16 = sphi 0, %s28
    %s17 = sphi 0, %s24
    %s18 = sphi 0, %s16
    %s19 = sphi 0, %s17
    %s20 = sphi 0, %s18
    %s21 = sphi 0, %s19
    %s29 = sphi 0, %s29
    %s31 = sphi 0, %s29
    %s32 = sphi 0, %s31
    %s46 = sphi 0, %s32
    %s50 = sphi 0, %s50
    %s52 = sphi 0, %s50
    %s53 = sphi 0, %s52
    %s67 = sphi 0, %s53
    %s75 = sphi 0, %s77
    %s78 = sphi 0, %s75
    %s79 = sphi 0, %s78
    %s95 = sphi 0, %s79
    %s103 = sphi 0, %s105
    %s106 = sphi 0, %s103
    %s107 = sphi 0, %s106
    %s123 = sphi 0, %s107
  $region4: #{flow_forward.2} parent=0 // loop_header_branch
    %12 = sbr.rel (%p10) target = $region8
  $region5: #{flow_forward.2} parent=0 // loop_body
    %s14 = ssub.s32 %s9, 1
    %s15 = ssub.s32 %s9, 2
    %s22 = sadd.s32 1, %s17
    %p23 = scmp.ge.s32.totalorder %s22, 1
    %s24 = scalar_select %p23, 0, %s22
    %s25 = sadd.s32 1, %s16
    %s26 = scalar_select %p23, %s25, %s16
    %p27 = scmp.ge.s32.totalorder %s26, 2
    %s28 = scalar_select %p27, 0, %s26
    %s30 = sadd.s32 %s29, 1
    %p33 = scmp.eq.s32.totalorder %s9, 1
    %p34 = scmp.ne.s32.totalorder %s29, %s31
    %p35 = scmp.eq.s32.totalorder %s9, 0
    %p36 = por %p34, %p35
    %p37 = scmp.ne.s32.totalorder %s29, %s31
    %p38 = scmp.eq.s32.totalorder %s14, 1
    %p39 = por %p37, %p38
    %p40 = scmp.ne.s32.totalorder %s31, %s32
    %p41 = scmp.eq.s32.totalorder %s14, 0
    %p42 = por %p40, %p41
    %p43 = scmp.ne.s32.totalorder %s31, %s32
    %p44 = scmp.eq.s32.totalorder %s15, 1
    %p45 = por %p43, %p44
    %p47 = scmp.ne.s32.totalorder %s32, %s46
    %p48 = scmp.eq.s32.totalorder %s15, 0
    %p49 = por %p47, %p48
    %s51 = sadd.s32 %s50, 1
    %p54 = scmp.eq.s32.totalorder %s9, 1
    %p55 = scmp.ne.s32.totalorder %s50, %s52
    %p56 = scmp.eq.s32.totalorder %s9, 0
    %p57 = por %p55, %p56
    %p58 = scmp.ne.s32.totalorder %s50, %s52
    %p59 = scmp.eq.s32.totalorder %s14, 1
    %p60 = por %p58, %p59
    %p61 = scmp.ne.s32.totalorder %s52, %s53
    %p62 = scmp.eq.s32.totalorder %s14, 0
    %p63 = por %p61, %p62
    %p64 = scmp.ne.s32.totalorder %s52, %s53
    %p65 = scmp.eq.s32.totalorder %s15, 1
    %p66 = por %p64, %p65
    %p68 = scmp.ne.s32.totalorder %s53, %s67
    %p69 = scmp.eq.s32.totalorder %s15, 0
    %p70 = por %p68, %p69
    %s71 = ssub.s32 %s16, %s28
    %s72 = ssub.s32 %s17, %s24
    %s73 = sor.u32 %s71, %s72
    %p74 = scmp.eq.s32.totalorder %s73, 0
    %s76 = sadd.s32 %s75, 1
    %s77 = scalar_select %p74, %s75, %s76
    %p80 = pneg %p74
    %p81 = scmp.eq.s32.totalorder %s9, 1
    %p82 = por %p80, %p81
    %p83 = scmp.ne.s32.totalorder %s75, %s78
    %p84 = scmp.eq.s32.totalorder %s9, 0
    %p85 = por %p83, %p84
    %p86 = scmp.ne.s32.totalorder %s75, %s78
    %p87 = scmp.eq.s32.totalorder %s14, 1
    %p88 = por %p86, %p87
    %p89 = scmp.ne.s32.totalorder %s78, %s79
    %p90 = scmp.eq.s32.totalorder %s14, 0
    %p91 = por %p89, %p90
    %p92 = scmp.ne.s32.totalorder %s78, %s79
    %p93 = scmp.eq.s32.totalorder %s15, 1
    %p94 = por %p92, %p93
    %p96 = scmp.ne.s32.totalorder %s79, %s95
    %p97 = scmp.eq.s32.totalorder %s15, 0
    %p98 = por %p96, %p97
    %s99 = ssub.s32 %s16, %s28
    %s100 = ssub.s32 %s17, %s24
    %s101 = sor.u32 %s99, %s100
    %p102 = scmp.eq.s32.totalorder %s101, 0
    %s104 = sadd.s32 %s103, 1
    %s105 = scalar_select %p102, %s103, %s104
    %p108 = pneg %p102
    %p109 = scmp.eq.s32.totalorder %s9, 1
    %p110 = por %p108, %p109
    %p111 = scmp.ne.s32.totalorder %s103, %s106
    %p112 = scmp.eq.s32.totalorder %s9, 0
    %p113 = por %p111, %p112
    %p114 = scmp.ne.s32.totalorder %s103, %s106
    %p115 = scmp.eq.s32.totalorder %s14, 1
    %p116 = por %p114, %p115
    %p117 = scmp.ne.s32.totalorder %s106, %s107
    %p118 = scmp.eq.s32.totalorder %s14, 0
    %p119 = por %p117, %p118
    %p120 = scmp.ne.s32.totalorder %s106, %s107
    %p121 = scmp.eq.s32.totalorder %s15, 1
    %p122 = por %p120, %p121
    %p124 = scmp.ne.s32.totalorder %s107, %s123
    %p125 = scmp.eq.s32.totalorder %s15, 0
    %p126 = por %p124, %p125
    %p127 = scmp.le.s32.totalorder 1, %s9
    %p128 = scmp.lt.s32.totalorder %s9, 3
    %p129 = pnand %p127, %p128
    %p130 = pneg %p129
    // Predicated region
    $region9: #{flow_forward.2} parent=5 // pred_check
      _
    $region10: #{flow_forward.2} parent=5 // pred_check_branch
      %132 = sbr.rel (%p129) target = $region12
    $region11: #{flow_forward.2} parent=5 // pred_region
      %s133 = ssub.s32 %s9, 1
      // Predicated region
      $region13: #{flow_forward.2} parent=11 // pred_check
        %p134 = pneg %p42
      $region14: #{flow_forward.2} parent=11 // pred_check_branch
        %136 = sbr.rel (%p134) target = $region16
      $region15: #{flow_forward.2} parent=11 // pred_region
        _
      $region16: #{flow_forward.2} parent=11 // pred_fallthru
        _
      // Predicated region
      $region17: #{flow_forward.2} parent=11 // pred_check
        %p137 = pneg %p63
      $region18: #{flow_forward.2} parent=11 // pred_check_branch
        %139 = sbr.rel (%p137) target = $region20
      $region19: #{flow_forward.2} parent=11 // pred_region
        _
      $region20: #{flow_forward.2} parent=11 // pred_fallthru
        _
    $region12: #{flow_forward.2} parent=5 // pred_fallthru
      _
    %p140 = scmp.lt.s32.totalorder %s9, 2
    // Predicated region
    $region21: #{flow_forward.2} parent=5 // pred_check
      %p141 = pneg %p140
    $region22: #{flow_forward.2} parent=5 // pred_check_branch
      %143 = sbr.rel (%p141) target = $region24
    $region23: #{flow_forward.2} parent=5 // pred_region
      // Predicated region
      $region25: #{flow_forward.2} parent=23 // pred_check
        %p144 = pneg %p85
      $region26: #{flow_forward.2} parent=23 // pred_check_branch
        %146 = sbr.rel (%p144) target = $region28
      $region27: #{flow_forward.2} parent=23 // pred_region
        %s147 = smul.u32 2, %s17
        %p148 = scmp.lt.s32.totalorder %s16, 1
        %s149 = scalar_select %p148, %s16, 1
        %p150 = scmp.lt.s32.totalorder %s147, 1
        %s151 = scalar_select %p150, %s147, 1
        %s152 = smul.addr %s149, 2
        %s153 = sadd.s32 %s151, %s152
        %s154 = smul.addr %s153, 4
        %s155 = scalar_lea.vmem %s2, %s154
        %s156 = smul.u32 2, %s17
      $region28: #{flow_forward.2} parent=23 // pred_fallthru
        _
    $region24: #{flow_forward.2} parent=5 // pred_fallthru
      _
    %p157 = scmp.le.s32.totalorder 1, %s9
    %p158 = scmp.lt.s32.totalorder %s9, 3
    %p159 = pnand %p157, %p158
    %p160 = pneg %p159
    // Predicated region
    $region29: #{flow_forward.2} parent=5 // pred_check
      _
    $region30: #{flow_forward.2} parent=5 // pred_check_branch
      %162 = sbr.rel (%p159) target = $region32
    $region31: #{flow_forward.2} parent=5 // pred_region
      %s163 = ssub.s32 %s9, 1
      %p164 = pneg %p42
      %p165 = pneg %p39
      %p166 = pneg %p63
      %p167 = pneg %p60
      %s168 = smul.u32 2, %s19
      %p169 = scmp.lt.s32.totalorder %s18, 1
      %s170 = scalar_select %p169, %s18, 1
      %p171 = scmp.lt.s32.totalorder %s168, 1
      %s172 = scalar_select %p171, %s168, 1
      %s173 = smul.addr %s170, 2
      %s174 = sadd.s32 %s172, %s173
      %s175 = smul.addr %s174, 4
      %s176 = scalar_lea.vmem %s2, %s175
      %p177 = pneg %p91
      %p178 = pneg %p88
      %p179 = pneg %p119
      %p180 = pneg %p116
      %s181 = smul.u32 2, %s19
      %p182 = scmp.lt.s32.totalorder %s18, 1
      %s183 = scalar_select %p182, %s18, 1
      %p184 = scmp.lt.s32.totalorder %s181, 1
      %s185 = scalar_select %p184, %s181, 1
      %s186 = smul.addr %s183, 2
      %s187 = sadd.s32 %s185, %s186
      %s188 = smul.addr %s187, 4
      %s189 = scalar_lea.vmem %s3, %s188
      %s190 = smul.u32 2, %s19
      %p191 = scmp.lt.s32.totalorder %s18, 1
      %s192 = scalar_select %p191, %s18, 1
      %p193 = scmp.lt.s32.totalorder %s190, 1
      %s194 = scalar_select %p193, %s190, 1
      %s195 = smul.addr %s192, 2
      %s196 = sadd.s32 %s194, %s195
      %s197 = smul.addr %s196, 4
      %s198 = scalar_lea.vmem %s2, %s197
      %s199 = smul.u32 2, %s19
      %s200 = smul.u32 2, %s19
      %p201 = scmp.lt.s32.totalorder %s18, 1
      %s202 = scalar_select %p201, %s18, 1
      %p203 = scmp.lt.s32.totalorder %s200, 1
      %s204 = scalar_select %p203, %s200, 1
      %s205 = smul.addr %s202, 2
      %s206 = sadd.s32 %s204, %s205
      %s207 = smul.addr %s206, 4
      %s208 = scalar_lea.vmem %s3, %s207
      %s209 = smul.u32 2, %s19
      %v210 = vld [vmem:[%s0] sm:$0xf]
      %v211 = vld [vmem:[%s198] sm:$0xff]
      %v212 = vld [vmem:[%s1] sm:$0xf]
      %214 = vset.pattern.permute.xlu0 0
      %215 = vperm.xlu0 %214, %v212
      %v216 = vpop.permute.xlu0 %215
      %v219 = vcombine.high %v211, %v211
      %vm220 = vcmask 31744
      %v222 = vsel %vm220, %v210, 0
      %vm224 = vcmask 1043456
      %v225 = vsel %vm224, %v211, 0
      %v227 = vsel %vm224, %v219, 0
      %229 = vmatprep.subr.mxu0 0.0
      %230 = vmatpush1.msra.mxu0 0.0
      %231 = vmatprep.subr.mxu0 0.0
      %232 = vmatpush1.msra.mxu0 0.0
      %233 = vmatprep.subr.mxu0 0.0
      %234 = vmatpush1.msra.mxu0 0.0
      %235 = vmatprep.subr.mxu0 0.0
      %236 = vmatpush1.msra.mxu0 0.0
      %237 = vmatprep.subr.mxu0 0.0
      %238 = vmatpush1.msra.mxu0 0.0
      %239 = vmatprep.subr.mxu0 0.0
      %240 = vmatpush1.msra.mxu0 0.0
      %241 = vmatprep.subr.mxu0 0.0
      %242 = vmatpush1.msra.mxu0 0.0
      %243 = vmatprep.subr.mxu0 0.0
      %244 = vmatpush1.msra.mxu0 0.0
      %245 = vmatprep.subr.mxu0 0.0
      %246 = vmatpush1.msra.mxu0 0.0
      %247 = vmatprep.subr.mxu0 0.0
      %248 = vmatpush1.msra.mxu0 0.0
      %249 = vmatprep.subr.mxu0 0.0
      %250 = vmatpush1.msra.mxu0 0.0
      %251 = vmatprep.subr.mxu0 0.0
      %252 = vmatpush1.msra.mxu0 0.0
      %253 = vmatprep.subr.mxu0 0.0
      %254 = vmatpush1.msra.mxu0 0.0
      %255 = vmatprep.subr.mxu0 0.0
      %256 = vmatpush1.msra.mxu0 0.0
      %257 = vmatprep.subr.mxu0 0.0
      %258 = vmatpush1.msra.mxu0 0.0
      %259 = vmatprep.subr.mxu0 %v227
      %260 = vmatpush1.msra.mxu0 %v225
      %261 = vmatprep.subr.mxu0 0.0
      %262 = vmatpush2.msra.mxu0 0.0
      %263 = vmatprep.subr.mxu0 0.0
      %264 = vmatpush2.msra.mxu0 0.0
      %265 = vmatprep.subr.mxu0 0.0
      %266 = vmatpush2.msra.mxu0 0.0
      %267 = vmatprep.subr.mxu0 0.0
      %268 = vmatpush2.msra.mxu0 0.0
      %269 = vmatprep.subr.mxu0 0.0
      %270 = vmatpush2.msra.mxu0 0.0
      %271 = vmatprep.subr.mxu0 0.0
      %272 = vmatpush2.msra.mxu0 0.0
      %273 = vmatprep.subr.mxu0 0.0
      %274 = vmatpush2.msra.mxu0 0.0
      %275 = vmatprep.subr.mxu0 0.0
      %276 = vmatpush2.msra.mxu0 0.0
      %277 = vmatprep.subr.mxu0 0.0
      %278 = vmatpush2.msra.mxu0 0.0
      %279 = vmatprep.subr.mxu0 0.0
      %280 = vmatpush2.msra.mxu0 0.0
      %281 = vmatprep.subr.mxu0 0.0
      %282 = vmatpush2.msra.mxu0 0.0
      %283 = vmatprep.subr.mxu0 0.0
      %284 = vmatpush2.msra.mxu0 0.0
      %285 = vmatprep.subr.mxu0 0.0
      %286 = vmatpush2.msra.mxu0 0.0
      %287 = vmatprep.subr.mxu0 0.0
      %288 = vmatpush2.msra.mxu0 0.0
      %289 = vmatprep.subr.mxu0 0.0
      %290 = vmatpush2.msra.mxu0 0.0
      %291 = vmatprep.subr.mxu0 0.0
      %292 = vmatpush2.msra.mxu0 0.0
      %293 = vmatprep.mubr.f32.mxu0 0.0
      %294 = vmatmul.mubr.f32.gmra.mxu0 %v222
      %v295 = vpop.f32.mrf.mxu0
      %v296 = vadd.f32 %v216, %v295
      %v297 = vpop.f32.mrf.mxu0
      %v298 = vadd.f32 %v216, %v297
      %299 = vdwg.mxu0
      %v302 = vcombine.low %v296, %v298
      %304 = vst [vmem:[%s208] sm:$0xff] %v302
      %s305 = smul.u32 2, %s19
      %p306 = scmp.lt.s32.totalorder %s18, 1
      %s307 = scalar_select %p306, %s18, 1
      %p308 = scmp.lt.s32.totalorder %s305, 1
      %s309 = scalar_select %p308, %s305, 1
      %s310 = smul.addr %s307, 2
      %s311 = sadd.s32 %s309, %s310
      %s312 = smul.addr %s311, 4
      %s313 = scalar_lea.vmem %s3, %s312
      // Predicated region
      $region33: #{flow_forward.2} parent=31 // pred_check
        %p314 = pneg %p116
      $region34: #{flow_forward.2} parent=31 // pred_check_branch
        %316 = sbr.rel (%p314) target = $region36
      $region35: #{flow_forward.2} parent=31 // pred_region
        %s317 = smul.u32 2, %s19
      $region36: #{flow_forward.2} parent=31 // pred_fallthru
        _
    $region32: #{flow_forward.2} parent=5 // pred_fallthru
      _
    %p318 = scmp.le.s32.totalorder 2, %s9
    // Predicated region
    $region37: #{flow_forward.2} parent=5 // pred_check
      %p319 = pneg %p318
    $region38: #{flow_forward.2} parent=5 // pred_check_branch
      %321 = sbr.rel (%p319) target = $region40
    $region39: #{flow_forward.2} parent=5 // pred_region
      %s322 = ssub.s32 %s9, 2
      // Predicated region
      $region41: #{flow_forward.2} parent=39 // pred_check
        %p323 = pneg %p122
      $region42: #{flow_forward.2} parent=39 // pred_check_branch
        %325 = sbr.rel (%p323) target = $region44
      $region43: #{flow_forward.2} parent=39 // pred_region
        %s326 = smul.u32 2, %s21
        %p327 = scmp.lt.s32.totalorder %s20, 1
        %s328 = scalar_select %p327, %s20, 1
        %p329 = scmp.lt.s32.totalorder %s326, 1
        %s330 = scalar_select %p329, %s326, 1
        %s331 = smul.addr %s328, 2
        %s332 = sadd.s32 %s330, %s331
        %s333 = smul.addr %s332, 4
        %s334 = scalar_lea.vmem %s3, %s333
      $region44: #{flow_forward.2} parent=39 // pred_fallthru
        _
    $region40: #{flow_forward.2} parent=5 // pred_fallthru
      _
  $region6: #{flow_forward.2} parent=0 // loop_footer
    %s13 = sadd.s32 1, %s9
  $region7: #{flow_forward.2} parent=0 // loop_footer_branch
    %8 = sbr.rel target = $region3
  $region8: #{flow_forward.2} parent=0 // loop_exit
    _

// kernel: flow_forward.3
$region0: #{flow_forward.3}
  #allocation0 [shape = 'u32[]', space=smem, size = 0x4, offset = 0x4, fixed_abs, tag = 'smem constant byte address 0x4 - core index']
  #allocation1 [shape = 'u32[144,128]{1,0:T(1,128)}', space=vmem, size = 0x12000, scoped, tag = 'internal scratch']
  %s0 = inlined_call_operand.vmem [shape: f32[2,4,256], index: 0, kind: input, shape index: {}]
  %s1 = inlined_call_operand.vmem [shape: f32[2,4,256], index: 1, kind: input, shape index: {}]
  %s2 = inlined_call_operand.vmem [shape: f32[2,4,256], index: 2, kind: output, shape index: {0}]
  %s3 = inlined_call_operand.vmem [shape: f32[2,1,1,1], index: 3, kind: output, shape index: {1}]
  %4 = xla_tuple %s2, %s3
  %s5 = sld [smem:[#allocation0]]
  $region49: #{flow_forward.3} parent=0
    _
  %s7 = ssub.s32 1, %s5
  %s8 = scalar_select 0, %s7, %s5
  loop: start=0, step=1, limit=4
  $region2: #{flow_forward.3} parent=0 // loop_pre_header
    _
  $region3: #{flow_forward.3} parent=0 // loop_header
    %s10 = sphi 0, %s14
    %p11 = scmp.ge.s32.totalorder %s10, 4
    %s17 = sphi 0, %s29
    %s18 = sphi 0, %s25
    %s19 = sphi 0, %s17
    %s20 = sphi 0, %s18
    %s21 = sphi 0, %s19
    %s22 = sphi 0, %s20
    %s34 = sphi 0, %s36
    %s37 = sphi 0, %s34
    %s38 = sphi 0, %s37
    %s54 = sphi 0, %s38
    %s62 = sphi 0, %s64
    %s65 = sphi 0, %s62
    %s66 = sphi 0, %s65
    %s82 = sphi 0, %s66
    %s90 = sphi 0, %s92
    %s93 = sphi 0, %s90
    %s94 = sphi 0, %s93
    %s110 = sphi 0, %s94
    %s118 = sphi 0, %s120
    %s121 = sphi 0, %s118
    %s122 = sphi 0, %s121
    %s138 = sphi 0, %s122
  $region4: #{flow_forward.3} parent=0 // loop_header_branch
    %13 = sbr.rel (%p11) target = $region8
  $region5: #{flow_forward.3} parent=0 // loop_body
    %s15 = ssub.s32 %s10, 1
    %s16 = ssub.s32 %s10, 2
    %s23 = sadd.s32 1, %s18
    %p24 = scmp.ge.s32.totalorder %s23, 1
    %s25 = scalar_select %p24, 0, %s23
    %s26 = sadd.s32 1, %s17
    %s27 = scalar_select %p24, %s26, %s17
    %p28 = scmp.ge.s32.totalorder %s27, 2
    %s29 = scalar_select %p28, 0, %s27
    %s30 = ssub.s32 %s17, %s29
    %s31 = ssub.s32 %s18, %s25
    %s32 = sor.u32 %s30, %s31
    %p33 = scmp.eq.s32.totalorder %s32, 0
    %s35 = sadd.s32 %s34, 1
    %s36 = scalar_select %p33, %s34, %s35
    %p39 = pneg %p33
    %p40 = scmp.eq.s32.totalorder %s10, 1
    %p41 = por %p39, %p40
    %p42 = scmp.ne.s32.totalorder %s34, %s37
    %p43 = scmp.eq.s32.totalorder %s10, 0
    %p44 = por %p42, %p43
    %p45 = scmp.ne.s32.totalorder %s34, %s37
    %p46 = scmp.eq.s32.totalorder %s15, 1
    %p47 = por %p45, %p46
    %p48 = scmp.ne.s32.totalorder %s37, %s38
    %p49 = scmp.eq.s32.totalorder %s15, 0
    %p50 = por %p48, %p49
    %p51 = scmp.ne.s32.totalorder %s37, %s38
    %p52 = scmp.eq.s32.totalorder %s16, 1
    %p53 = por %p51, %p52
    %p55 = scmp.ne.s32.totalorder %s38, %s54
    %p56 = scmp.eq.s32.totalorder %s16, 0
    %p57 = por %p55, %p56
    %s58 = ssub.s32 %s17, %s29
    %s59 = ssub.s32 %s18, %s25
    %s60 = sor.u32 %s58, %s59
    %p61 = scmp.eq.s32.totalorder %s60, 0
    %s63 = sadd.s32 %s62, 1
    %s64 = scalar_select %p61, %s62, %s63
    %p67 = pneg %p61
    %p68 = scmp.eq.s32.totalorder %s10, 1
    %p69 = por %p67, %p68
    %p70 = scmp.ne.s32.totalorder %s62, %s65
    %p71 = scmp.eq.s32.totalorder %s10, 0
    %p72 = por %p70, %p71
    %p73 = scmp.ne.s32.totalorder %s62, %s65
    %p74 = scmp.eq.s32.totalorder %s15, 1
    %p75 = por %p73, %p74
    %p76 = scmp.ne.s32.totalorder %s65, %s66
    %p77 = scmp.eq.s32.totalorder %s15, 0
    %p78 = por %p76, %p77
    %p79 = scmp.ne.s32.totalorder %s65, %s66
    %p80 = scmp.eq.s32.totalorder %s16, 1
    %p81 = por %p79, %p80
    %p83 = scmp.ne.s32.totalorder %s66, %s82
    %p84 = scmp.eq.s32.totalorder %s16, 0
    %p85 = por %p83, %p84
    %s86 = ssub.s32 %s17, %s29
    %s87 = ssub.s32 %s18, %s25
    %s88 = sor.u32 %s86, %s87
    %p89 = scmp.eq.s32.totalorder %s88, 0
    %s91 = sadd.s32 %s90, 1
    %s92 = scalar_select %p89, %s90, %s91
    %p95 = pneg %p89
    %p96 = scmp.eq.s32.totalorder %s10, 1
    %p97 = por %p95, %p96
    %p98 = scmp.ne.s32.totalorder %s90, %s93
    %p99 = scmp.eq.s32.totalorder %s10, 0
    %p100 = por %p98, %p99
    %p101 = scmp.ne.s32.totalorder %s90, %s93
    %p102 = scmp.eq.s32.totalorder %s15, 1
    %p103 = por %p101, %p102
    %p104 = scmp.ne.s32.totalorder %s93, %s94
    %p105 = scmp.eq.s32.totalorder %s15, 0
    %p106 = por %p104, %p105
    %p107 = scmp.ne.s32.totalorder %s93, %s94
    %p108 = scmp.eq.s32.totalorder %s16, 1
    %p109 = por %p107, %p108
    %p111 = scmp.ne.s32.totalorder %s94, %s110
    %p112 = scmp.eq.s32.totalorder %s16, 0
    %p113 = por %p111, %p112
    %s114 = ssub.s32 %s17, %s29
    %s115 = ssub.s32 %s18, %s25
    %s116 = sor.u32 %s114, %s115
    %p117 = scmp.eq.s32.totalorder %s116, 0
    %s119 = sadd.s32 %s118, 1
    %s120 = scalar_select %p117, %s118, %s119
    %p123 = pneg %p117
    %p124 = scmp.eq.s32.totalorder %s10, 1
    %p125 = por %p123, %p124
    %p126 = scmp.ne.s32.totalorder %s118, %s121
    %p127 = scmp.eq.s32.totalorder %s10, 0
    %p128 = por %p126, %p127
    %p129 = scmp.ne.s32.totalorder %s118, %s121
    %p130 = scmp.eq.s32.totalorder %s15, 1
    %p131 = por %p129, %p130
    %p132 = scmp.ne.s32.totalorder %s121, %s122
    %p133 = scmp.eq.s32.totalorder %s15, 0
    %p134 = por %p132, %p133
    %p135 = scmp.ne.s32.totalorder %s121, %s122
    %p136 = scmp.eq.s32.totalorder %s16, 1
    %p137 = por %p135, %p136
    %p139 = scmp.ne.s32.totalorder %s122, %s138
    %p140 = scmp.eq.s32.totalorder %s16, 0
    %p141 = por %p139, %p140
    %p142 = scmp.le.s32.totalorder 1, %s10
    %p143 = scmp.lt.s32.totalorder %s10, 3
    %p144 = pnand %p142, %p143
    %p145 = pneg %p144
    // Predicated region
    $region9: #{flow_forward.3} parent=5 // pred_check
      _
    $region10: #{flow_forward.3} parent=5 // pred_check_branch
      %147 = sbr.rel (%p144) target = $region12
    $region11: #{flow_forward.3} parent=5 // pred_region
      %s148 = ssub.s32 %s10, 1
    $region12: #{flow_forward.3} parent=5 // pred_fallthru
      _
    %p149 = scmp.lt.s32.totalorder %s10, 2
    // Predicated region
    $region13: #{flow_forward.3} parent=5 // pred_check
      %p150 = pneg %p149
    $region14: #{flow_forward.3} parent=5 // pred_check_branch
      %152 = sbr.rel (%p150) target = $region16
    $region15: #{flow_forward.3} parent=5 // pred_region
      // Predicated region
      $region17: #{flow_forward.3} parent=15 // pred_check
        %p153 = pneg %p44
      $region18: #{flow_forward.3} parent=15 // pred_check_branch
        %155 = sbr.rel (%p153) target = $region20
      $region19: #{flow_forward.3} parent=15 // pred_region
        %s156 = smul.u32 2, %s18
        %p157 = scmp.lt.s32.totalorder %s17, 1
        %s158 = scalar_select %p157, %s17, 1
        %p159 = scmp.lt.s32.totalorder %s156, 1
        %s160 = scalar_select %p159, %s156, 1
        %s161 = smul.addr %s158, 2
        %s162 = sadd.s32 %s160, %s161
        %s163 = smul.addr %s162, 4
        %s164 = scalar_lea.vmem %s0, %s163
        %s165 = smul.u32 2, %s18
      $region20: #{flow_forward.3} parent=15 // pred_fallthru
        _
      // Predicated region
      $region21: #{flow_forward.3} parent=15 // pred_check
        %p166 = pneg %p72
      $region22: #{flow_forward.3} parent=15 // pred_check_branch
        %168 = sbr.rel (%p166) target = $region24
      $region23: #{flow_forward.3} parent=15 // pred_region
        %s169 = smul.u32 2, %s18
        %p170 = scmp.lt.s32.totalorder %s17, 1
        %s171 = scalar_select %p170, %s17, 1
        %p172 = scmp.lt.s32.totalorder %s169, 1
        %s173 = scalar_select %p172, %s169, 1
        %s174 = smul.addr %s171, 2
        %s175 = sadd.s32 %s173, %s174
        %s176 = smul.addr %s175, 4
        %s177 = scalar_lea.vmem %s1, %s176
        %s178 = smul.u32 2, %s18
      $region24: #{flow_forward.3} parent=15 // pred_fallthru
        _
    $region16: #{flow_forward.3} parent=5 // pred_fallthru
      _
    %p179 = scmp.le.s32.totalorder 1, %s10
    %p180 = scmp.lt.s32.totalorder %s10, 3
    %p181 = pnand %p179, %p180
    %p182 = pneg %p181
    // Predicated region
    $region25: #{flow_forward.3} parent=5 // pred_check
      _
    $region26: #{flow_forward.3} parent=5 // pred_check_branch
      %184 = sbr.rel (%p181) target = $region28
    $region27: #{flow_forward.3} parent=5 // pred_region
      %s185 = ssub.s32 %s10, 1
      %s186 = smul.u32 2, %s20
      %p187 = scmp.lt.s32.totalorder %s19, 1
      %s188 = scalar_select %p187, %s19, 1
      %p189 = scmp.lt.s32.totalorder %s186, 1
      %s190 = scalar_select %p189, %s186, 1
      %s191 = smul.addr %s188, 2
      %s192 = sadd.s32 %s190, %s191
      %s193 = smul.addr %s192, 4
      %s194 = scalar_lea.vmem %s0, %s193
      %p195 = pneg %p50
      %p196 = pneg %p47
      %s197 = smul.u32 2, %s20
      %p198 = scmp.lt.s32.totalorder %s19, 1
      %s199 = scalar_select %p198, %s19, 1
      %p200 = scmp.lt.s32.totalorder %s197, 1
      %s201 = scalar_select %p200, %s197, 1
      %s202 = smul.addr %s199, 2
      %s203 = sadd.s32 %s201, %s202
      %s204 = smul.addr %s203, 4
      %s205 = scalar_lea.vmem %s1, %s204
      %p206 = pneg %p78
      %p207 = pneg %p75
      %p208 = pneg %p106
      %p209 = pneg %p103
      %s210 = smul.u32 2, %s20
      %p211 = scmp.lt.s32.totalorder %s19, 1
      %s212 = scalar_select %p211, %s19, 1
      %p213 = scmp.lt.s32.totalorder %s210, 1
      %s214 = scalar_select %p213, %s210, 1
      %s215 = smul.addr %s212, 2
      %s216 = sadd.s32 %s214, %s215
      %s217 = smul.addr %s216, 4
      %s218 = scalar_lea.vmem %s2, %s217
      %p219 = pneg %p134
      %p220 = pneg %p131
      %p221 = scmp.lt.s32.totalorder %s19, 1
      %s222 = scalar_select %p221, %s19, 1
      %p223 = scmp.lt.s32.totalorder %s20, 0
      %s224 = scalar_select %p223, %s20, 0
      %s225 = sadd.s32 %s224, %s222
      %s226 = scalar_lea.vmem %s3, %s225
      %s227 = smul.u32 2, %s20
      %p228 = scmp.lt.s32.totalorder %s19, 1
      %s229 = scalar_select %p228, %s19, 1
      %p230 = scmp.lt.s32.totalorder %s227, 1
      %s231 = scalar_select %p230, %s227, 1
      %s232 = smul.addr %s229, 2
      %s233 = sadd.s32 %s231, %s232
      %s234 = smul.addr %s233, 4
      %s235 = scalar_lea.vmem %s0, %s234
      %s236 = smul.u32 2, %s20
      %s237 = smul.u32 2, %s20
      %p238 = scmp.lt.s32.totalorder %s19, 1
      %s239 = scalar_select %p238, %s19, 1
      %p240 = scmp.lt.s32.totalorder %s237, 1
      %s241 = scalar_select %p240, %s237, 1
      %s242 = smul.addr %s239, 2
      %s243 = sadd.s32 %s241, %s242
      %s244 = smul.addr %s243, 4
      %s245 = scalar_lea.vmem %s1, %s244
      %s246 = smul.u32 2, %s20
      %s247 = smul.u32 2, %s20
      %p248 = scmp.lt.s32.totalorder %s19, 1
      %s249 = scalar_select %p248, %s19, 1
      %p250 = scmp.lt.s32.totalorder %s247, 1
      %s251 = scalar_select %p250, %s247, 1
      %s252 = smul.addr %s249, 2
      %s253 = sadd.s32 %s251, %s252
      %s254 = smul.addr %s253, 4
      %s255 = scalar_lea.vmem %s2, %s254
      %s256 = smul.u32 2, %s20
      %p257 = scmp.lt.s32.totalorder %s19, 1
      %s258 = scalar_select %p257, %s19, 1
      %p259 = scmp.lt.s32.totalorder %s20, 0
      %s260 = scalar_select %p259, %s20, 0
      %s261 = sadd.s32 %s260, %s258
      %s262 = scalar_lea.vmem %s3, %s261
      %v263 = vld [vmem:[%s235] sm:$0x33]
      %v264 = vld [vmem:[%s235] sm:$0xcc]
      %v265 = vld [vmem:[%s245] sm:$0x33]
      %v266 = vld [vmem:[%s245] sm:$0xcc]
      %v267 = vadd.f32 %v266, 2.0
      %v268 = vsub.f32 0.0, %v267
      %v269 = vmul.f32 %v268, 1.442695
      %v270 = vpow.pop %v269
      %v271 = vadd.f32 %v270, 1.0
      %v272 = vrcp.pop %v271
      %v273 = vmul.f32 1.0, %v272
      %v274 = vadd.f32 %v273, 1e-09
      %v275 = vadd.f32 %v263, %v265
      %v277 = vrot.slane %v274, 6
      %v278 = vrot.slane %v277, 4
      %v280 = vmul.f32 %v275, %v278
      %281 = vst [vmem:[%s255] sm:$0x33] %v280
      %282 = vst [vmem:[%s255] sm:$0xcc] %v264
      %v283 = vlog2.pop %v274
      %v284 = vmul.f32 %v283, 0.6931472
      %v286 = vcombine.high %v284, %v284
      %v287 = vrot.slane %v284, 2
      %v288 = vrot.slane %v286, 2
      %vm291 = vcmask 1041408
      %v292 = vsel %vm291, %v287, 0.0
      %v293 = vsel %vm291, %v288, 0.0
      %v294 = vadd.f32 %v292, %v293
      %295 = vadd.xlane.f32.xlu0 %v294
      %v296 = vpop.xlane.xlu0 %295
      %v297 = vrot.slane %v296, 4
      %v298 = vadd.f32 %v296, %v297
      %v299 = vrot.slane %v298, 2
      %v300 = vadd.f32 %v298, %v299
      %v301 = vrot.slane %v300, 1
      %v302 = vadd.f32 %v300, %v301
      %s303 = vtos %v302
      %v304 = vstv %s303
      %vm305 = vcmask 0
      %306 = vst.msk [vmem:[%s262] sm:$0x1] %vm305, %v304
      %s307 = smul.u32 2, %s20
      %p308 = scmp.lt.s32.totalorder %s19, 1
      %s309 = scalar_select %p308, %s19, 1
      %p310 = scmp.lt.s32.totalorder %s307, 1
      %s311 = scalar_select %p310, %s307, 1
      %s312 = smul.addr %s309, 2
      %s313 = sadd.s32 %s311, %s312
      %s314 = smul.addr %s313, 4
      %s315 = scalar_lea.vmem %s2, %s314
      %p316 = scmp.lt.s32.totalorder %s19, 1
      %s317 = scalar_select %p316, %s19, 1
      %p318 = scmp.lt.s32.totalorder %s20, 0
      %s319 = scalar_select %p318, %s20, 0
      %s320 = sadd.s32 %s319, %s317
      %s321 = scalar_lea.vmem %s3, %s320
      // Predicated region
      $region29: #{flow_forward.3} parent=27 // pred_check
        %p322 = pneg %p103
      $region30: #{flow_forward.3} parent=27 // pred_check_branch
        %324 = sbr.rel (%p322) target = $region32
      $region31: #{flow_forward.3} parent=27 // pred_region
        %s325 = smul.u32 2, %s20
      $region32: #{flow_forward.3} parent=27 // pred_fallthru
        _
      // Predicated region
      $region33: #{flow_forward.3} parent=27 // pred_check
        %p326 = pneg %p131
      $region34: #{flow_forward.3} parent=27 // pred_check_branch
        %328 = sbr.rel (%p326) target = $region36
      $region35: #{flow_forward.3} parent=27 // pred_region
        _
      $region36: #{flow_forward.3} parent=27 // pred_fallthru
        _
    $region28: #{flow_forward.3} parent=5 // pred_fallthru
      _
    %p329 = scmp.le.s32.totalorder 2, %s10
    // Predicated region
    $region37: #{flow_forward.3} parent=5 // pred_check
      %p330 = pneg %p329
    $region38: #{flow_forward.3} parent=5 // pred_check_branch
      %332 = sbr.rel (%p330) target = $region40
    $region39: #{flow_forward.3} parent=5 // pred_region
      %s333 = ssub.s32 %s10, 2
      // Predicated region
      $region41: #{flow_forward.3} parent=39 // pred_check
        %p334 = pneg %p109
      $region42: #{flow_forward.3} parent=39 // pred_check_branch
        %336 = sbr.rel (%p334) target = $region44
      $region43: #{flow_forward.3} parent=39 // pred_region
        %s337 = smul.u32 2, %s22
        %p338 = scmp.lt.s32.totalorder %s21, 1
        %s339 = scalar_select %p338, %s21, 1
        %p340 = scmp.lt.s32.totalorder %s337, 1
        %s341 = scalar_select %p340, %s337, 1
        %s342 = smul.addr %s339, 2
        %s343 = sadd.s32 %s341, %s342
        %s344 = smul.addr %s343, 4
        %s345 = scalar_lea.vmem %s2, %s344
      $region44: #{flow_forward.3} parent=39 // pred_fallthru
        _
      // Predicated region
      $region45: #{flow_forward.3} parent=39 // pred_check
        %p346 = pneg %p137
      $region46: #{flow_forward.3} parent=39 // pred_check_branch
        %348 = sbr.rel (%p346) target = $region48
      $region47: #{flow_forward.3} parent=39 // pred_region
        %p349 = scmp.lt.s32.totalorder %s21, 1
        %s350 = scalar_select %p349, %s21, 1
        %p351 = scmp.lt.s32.totalorder %s22, 0
        %s352 = scalar_select %p351, %s22, 0
        %s353 = sadd.s32 %s352, %s350
        %s354 = scalar_lea.vmem %s3, %s353
      $region48: #{flow_forward.3} parent=39 // pred_fallthru
        _
    $region40: #{flow_forward.3} parent=5 // pred_fallthru
      _
  $region6: #{flow_forward.3} parent=0 // loop_footer
    %s14 = sadd.s32 1, %s10
  $region7: #{flow_forward.3} parent=0 // loop_footer_branch
    %9 = sbr.rel target = $region3
  $region8: #{flow_forward.3} parent=0 // loop_exit
    _

</llo_original>
